<compile_context>
chip_gen: v5e
topology: v5e:2x2
jax: 0.10.0
libtpu: 0.0.40
codegen_flags: <defaults>
</compile_context>

<pallas_src>
import functools
import math

import jax
import jax.numpy as jnp
from jax.experimental import pallas as pl
from jax.experimental.pallas import tpu as pltpu


def _mha_kernel(q_ref, k_ref,
                wq_ref, bq_ref, wkv_ref, bkv_ref, wo_ref, bo_ref,
                o_ref,
                *, heads, head_dim):
    """One grid step = one block of TB batch elements; full seq/model in VMEM."""
    TB, S, D = q_ref.shape
    scale = 1.0 / math.sqrt(head_dim)

    # Flatten (TB, S, D) -> (TB*S, D) (leading-dim merge only; lane dim intact)
    # and cast matmul operands to bf16; accumulate in f32 on the MXU.
    q2 = q_ref[...].reshape(TB * S, D).astype(jnp.bfloat16)
    k2 = k_ref[...].reshape(TB * S, D).astype(jnp.bfloat16)

    # Projections: Q (N = D) plus fused K|V (N = 2D)  -> two wide MXU pushes.
    Q = jnp.dot(q2, wq_ref[...], preferred_element_type=jnp.float32) + bq_ref[...]
    KV = jnp.dot(k2, wkv_ref[...], preferred_element_type=jnp.float32) + bkv_ref[...]

    # Keep projected activations as bf16 values; heads are static lane slices.
    Qb = Q.reshape(TB, S, D).astype(jnp.bfloat16)
    Kb = KV[:, :D].reshape(TB, S, D).astype(jnp.bfloat16)
    Vb = KV[:, D:].reshape(TB, S, D).astype(jnp.bfloat16)

    # Per-head attention.  Head columns are addressed with static lane-dim
    # slices -- no reshape(S,H,hd)/transpose XLU shuffles of the activations.
    ctx_heads = []
    for h in range(heads):
        sl = slice(h * head_dim, (h + 1) * head_dim)
        qh = Qb[:, :, sl]                                               # (TB, S, hd)
        kh = Kb[:, :, sl]                                               # (TB, S, hd)
        vh = Vb[:, :, sl]                                               # (TB, S, hd)

        scores = jnp.einsum('bqd,bkd->bqk', qh, kh,
                            preferred_element_type=jnp.float32) * scale  # (TB,S,S) f32

        # Softmax along the last axis (f32; denominator via EUP vrcp).
        m = jnp.max(scores, axis=-1, keepdims=True)
        e = jnp.exp(scores - m)
        denom = jnp.sum(e, axis=-1, keepdims=True)
        w = e * pl.reciprocal(denom, approx=True)

        ctx_h = jnp.einsum('bqk,bkd->bqd', w.astype(jnp.bfloat16), vh,
                           preferred_element_type=jnp.float32)          # (TB,S,hd)
        ctx_heads.append(ctx_h.astype(jnp.bfloat16))

    # Merge heads along lanes (the PyTorch permute+reshape) and project out.
    ctx = jnp.concatenate(ctx_heads, axis=-1).reshape(TB * S, D)        # bf16
    out = jnp.dot(ctx, wo_ref[...], preferred_element_type=jnp.float32) + bo_ref[...]
    o_ref[...] = out.reshape(TB, S, D).astype(o_ref.dtype)


def multi_head_attention(query, keys, params, *, heads, batch_block=None):
    """query, keys: (B, S, D) float32. params: dict of PyTorch-convention weights."""
    B, S, D = query.shape
    assert D % heads == 0, "model_size must be divisible by headers"
    head_dim = D // heads

    # Fold the whole (tiny) batch into one grid step by default; tile otherwise.
    TB = B if batch_block is None else batch_block
    assert B % TB == 0

    # Pre-transpose Linear weights so the kernel does x @ W_t (== x @ W.T).
    # K and V are fused side-by-side; everything MXU-bound is cast to bf16.
    wq_t = params["wq"].T.astype(jnp.bfloat16)                                   # (D, D)
    wkv_t = jnp.concatenate([params["wk"].T, params["wv"].T], axis=1)            # (D, 2D)
    wkv_t = wkv_t.astype(jnp.bfloat16)
    wo_t = params["wo"].T.astype(jnp.bfloat16)                                   # (D, D)
    bq = params["bq"].reshape(1, D).astype(jnp.float32)
    bkv = jnp.concatenate([params["bk"], params["bv"]]).reshape(1, 2 * D)
    bkv = bkv.astype(jnp.float32)
    bo = params["bo"].reshape(1, D).astype(jnp.float32)

    kernel = functools.partial(_mha_kernel, heads=heads, head_dim=head_dim)

    seq_blk = pl.BlockSpec((TB, S, D), lambda b: (b, 0, 0))
    w_dd = pl.BlockSpec((D, D), lambda b: (0, 0))
    w_d2d = pl.BlockSpec((D, 2 * D), lambda b: (0, 0))
    b_d = pl.BlockSpec((1, D), lambda b: (0, 0))
    b_2d = pl.BlockSpec((1, 2 * D), lambda b: (0, 0))

    return pl.pallas_call(
        kernel,
        out_shape=jax.ShapeDtypeStruct((B, S, D), query.dtype),
        grid_spec=pltpu.PrefetchScalarGridSpec(
            num_scalar_prefetch=0,
            grid=(B // TB,),
            in_specs=[
                seq_blk,            # query
                seq_blk,            # keys
                w_dd, b_d,          # W_q, b_q
                w_d2d, b_2d,        # [W_k | W_v], [b_k | b_v]
                w_dd, b_d,          # W_o, b_o
            ],
            out_specs=seq_blk,
        ),
        compiler_params=pltpu.CompilerParams(
            dimension_semantics=("parallel",)),
    )(query, keys, wq_t, bq, wkv_t, bkv, wo_t, bo)


def _reference(query, keys, params, heads):
    """Plain-JAX f32 reference matching the PyTorch forward (dropout in eval mode)."""
    B, S, D = query.shape
    hd = D // heads

    def lin(x, w, b):
        return x @ w.T + b

    def split(v):  # (B,S,D) -> (B,H,S,hd)
        return v.reshape(B, S, heads, hd).transpose(0, 2, 1, 3)

    Q = split(lin(query, params["wq"], params["bq"]))
    K = split(lin(keys, params["wk"], params["bk"]))
    V = split(lin(keys, params["wv"], params["bv"]))
    scores = Q @ K.transpose(0, 1, 3, 2) / math.sqrt(hd)
    w = jax.nn.softmax(scores, axis=-1)
    ctx = w @ V
    ctx = ctx.transpose(0, 2, 1, 3).reshape(B, S, D)
    return lin(ctx, params["wo"], params["bo"])


if __name__ == "__main__":
    # Small shapes consistent with the module: batch=2, seq=8, model_size=32, heads=4.
    B, S, D, H = 2, 8, 32, 4

    key = jax.random.PRNGKey(0)
    ks = jax.random.split(key, 10)

    scale = 1.0 / math.sqrt(D)
    params = {
        "wq": jax.random.uniform(ks[0], (D, D), jnp.float32, -scale, scale),
        "bq": jax.random.uniform(ks[1], (D,), jnp.float32, -scale, scale),
        "wk": jax.random.uniform(ks[2], (D, D), jnp.float32, -scale, scale),
        "bk": jax.random.uniform(ks[3], (D,), jnp.float32, -scale, scale),
        "wv": jax.random.uniform(ks[4], (D, D), jnp.float32, -scale, scale),
        "bv": jax.random.uniform(ks[5], (D,), jnp.float32, -scale, scale),
        "wo": jax.random.uniform(ks[6], (D, D), jnp.float32, -scale, scale),
        "bo": jax.random.uniform(ks[7], (D,), jnp.float32, -scale, scale),
    }

    query = jax.random.normal(ks[8], (B, S, D), jnp.float32)
    keys_in = jax.random.normal(ks[9], (B, S, D), jnp.float32)

    out = multi_head_attention(query, keys_in, params, heads=H)
    out = jax.block_until_ready(out)

    ref = _reference(query, keys_in, params, H)
    assert out.shape == (B, S, D)
    # Tolerance loosened vs. a pure-f32 version: MXU operands are bf16 (f32 accum).
    assert jnp.allclose(out, ref, atol=5e-2, rtol=5e-2), (
        f"max abs err = {jnp.max(jnp.abs(out - ref))}")

    print("KERNEL_OK")
</pallas_src>

<mosaic_0001>
module attributes {stable_mosaic.version = 11 : i64} {
  func.func @_mha_kernel(%arg0: i32, %arg1: memref<2x8x32xf32, #tpu.memory_space<vmem>>, %arg2: memref<2x8x32xf32, #tpu.memory_space<vmem>>, %arg3: memref<32x32xbf16, #tpu.memory_space<vmem>>, %arg4: memref<1x32xf32, #tpu.memory_space<vmem>>, %arg5: memref<32x64xbf16, #tpu.memory_space<vmem>>, %arg6: memref<1x64xf32, #tpu.memory_space<vmem>>, %arg7: memref<32x32xbf16, #tpu.memory_space<vmem>>, %arg8: memref<1x32xf32, #tpu.memory_space<vmem>>, %arg9: memref<2x8x32xf32, #tpu.memory_space<vmem>>) attributes {dimension_semantics = [#tpu.dimension_semantics<parallel>], iteration_bounds = array<i64: 1>, scalar_prefetch = 0 : i64, scratch_operands = 0 : i64, tpu.core_type = #tpu.core_type<tc>, window_params = [{transform_indices = @transform_0, window_bounds = array<i64: 2, 8, 32>}, {transform_indices = @transform_1, window_bounds = array<i64: 2, 8, 32>}, {pipeline_mode = #tpu.pipeline_mode<synchronous>, transform_indices = @transform_2, window_bounds = array<i64: 32, 32>}, {pipeline_mode = #tpu.pipeline_mode<synchronous>, transform_indices = @transform_3, window_bounds = array<i64: 1, 32>}, {pipeline_mode = #tpu.pipeline_mode<synchronous>, transform_indices = @transform_4, window_bounds = array<i64: 32, 64>}, {pipeline_mode = #tpu.pipeline_mode<synchronous>, transform_indices = @transform_5, window_bounds = array<i64: 1, 64>}, {pipeline_mode = #tpu.pipeline_mode<synchronous>, transform_indices = @transform_6, window_bounds = array<i64: 32, 32>}, {pipeline_mode = #tpu.pipeline_mode<synchronous>, transform_indices = @transform_7, window_bounds = array<i64: 1, 32>}, {transform_indices = @transform_8, window_bounds = array<i64: 2, 8, 32>}]} {
    %c0 = arith.constant 0 : index
    %c0_0 = arith.constant 0 : index
    %c0_1 = arith.constant 0 : index
    %0 = vector.load %arg1[%c0, %c0_0, %c0_1] : memref<2x8x32xf32, #tpu.memory_space<vmem>>, vector<2x8x32xf32>
    %1 = vector.shape_cast %0 : vector<2x8x32xf32> to vector<16x32xf32>
    %2 = arith.truncf %1 : vector<16x32xf32> to vector<16x32xbf16>
    %c0_2 = arith.constant 0 : index
    %c0_3 = arith.constant 0 : index
    %c0_4 = arith.constant 0 : index
    %3 = vector.load %arg2[%c0_2, %c0_3, %c0_4] : memref<2x8x32xf32, #tpu.memory_space<vmem>>, vector<2x8x32xf32>
    %4 = vector.shape_cast %3 : vector<2x8x32xf32> to vector<16x32xf32>
    %5 = arith.truncf %4 : vector<16x32xf32> to vector<16x32xbf16>
    %c0_5 = arith.constant 0 : index
    %c0_6 = arith.constant 0 : index
    %6 = vector.load %arg3[%c0_5, %c0_6] : memref<32x32xbf16, #tpu.memory_space<vmem>>, vector<32x32xbf16>
    %cst = arith.constant dense<0.000000e+00> : vector<16x32xf32>
    %7 = tpu.matmul %2, %6, %cst {dimension_numbers = #tpu.dot_dimension_numbers<[1], [0], [0], [1], [0, 0, 1, 1], [], []>} : vector<16x32xbf16>, vector<32x32xbf16>, vector<16x32xf32> -> vector<16x32xf32>
    %c0_7 = arith.constant 0 : index
    %c0_8 = arith.constant 0 : index
    %8 = vector.load %arg4[%c0_7, %c0_8] : memref<1x32xf32, #tpu.memory_space<vmem>>, vector<1x32xf32>
    %9 = vector.broadcast %8 : vector<1x32xf32> to vector<16x32xf32>
    %10 = arith.addf %7, %9 : vector<16x32xf32>
    %c0_9 = arith.constant 0 : index
    %c0_10 = arith.constant 0 : index
    %11 = vector.load %arg5[%c0_9, %c0_10] : memref<32x64xbf16, #tpu.memory_space<vmem>>, vector<32x64xbf16>
    %cst_11 = arith.constant dense<0.000000e+00> : vector<16x64xf32>
    %12 = tpu.matmul %5, %11, %cst_11 {dimension_numbers = #tpu.dot_dimension_numbers<[1], [0], [0], [1], [0, 0, 1, 1], [], []>} : vector<16x32xbf16>, vector<32x64xbf16>, vector<16x64xf32> -> vector<16x64xf32>
    %c0_12 = arith.constant 0 : index
    %c0_13 = arith.constant 0 : index
    %13 = vector.load %arg6[%c0_12, %c0_13] : memref<1x64xf32, #tpu.memory_space<vmem>>, vector<1x64xf32>
    %14 = vector.broadcast %13 : vector<1x64xf32> to vector<16x64xf32>
    %15 = arith.addf %12, %14 : vector<16x64xf32>
    %16 = vector.shape_cast %10 : vector<16x32xf32> to vector<2x8x32xf32>
    %17 = arith.truncf %16 : vector<2x8x32xf32> to vector<2x8x32xbf16>
    %18 = vector.extract_strided_slice %15 {offsets = [0, 0], sizes = [16, 32], strides = [1, 1]} : vector<16x64xf32> to vector<16x32xf32>
    %19 = vector.shape_cast %18 : vector<16x32xf32> to vector<2x8x32xf32>
    %20 = arith.truncf %19 : vector<2x8x32xf32> to vector<2x8x32xbf16>
    %21 = vector.extract_strided_slice %15 {offsets = [0, 32], sizes = [16, 32], strides = [1, 1]} : vector<16x64xf32> to vector<16x32xf32>
    %22 = vector.shape_cast %21 : vector<16x32xf32> to vector<2x8x32xf32>
    %23 = arith.truncf %22 : vector<2x8x32xf32> to vector<2x8x32xbf16>
    %24 = vector.extract_strided_slice %17 {offsets = [0, 0, 0], sizes = [2, 8, 8], strides = [1, 1, 1]} : vector<2x8x32xbf16> to vector<2x8x8xbf16>
    %25 = vector.extract_strided_slice %20 {offsets = [0, 0, 0], sizes = [2, 8, 8], strides = [1, 1, 1]} : vector<2x8x32xbf16> to vector<2x8x8xbf16>
    %26 = vector.extract_strided_slice %23 {offsets = [0, 0, 0], sizes = [2, 8, 8], strides = [1, 1, 1]} : vector<2x8x32xbf16> to vector<2x8x8xbf16>
    "tpu.trace_start"() <{level = 10 : i32, message = "bqd,bkd->bqk"}> : () -> ()
    %cst_14 = arith.constant dense<0.000000e+00> : vector<2x8x8xf32>
    %27 = tpu.matmul %24, %25, %cst_14 {dimension_numbers = #tpu.dot_dimension_numbers<[2], [2], [1], [1], [0, 0, 0, 1, 1, 1], [0], [0]>} : vector<2x8x8xbf16>, vector<2x8x8xbf16>, vector<2x8x8xf32> -> vector<2x8x8xf32>
    "tpu.trace_stop"() : () -> ()
    %cst_15 = arith.constant 0.353553385 : f32
    %28 = vector.broadcast %cst_15 : f32 to vector<2x8x8xf32>
    %29 = arith.mulf %27, %28 : vector<2x8x8xf32>
    %cst_16 = arith.constant dense<0xFF800000> : vector<2x8xf32>
    %30 = vector.multi_reduction <maximumf>, %29, %cst_16 [2] : vector<2x8x8xf32> to vector<2x8xf32>
    %31 = vector.shape_cast %30 : vector<2x8xf32> to vector<2x8x1xf32>
    %32 = vector.broadcast %31 : vector<2x8x1xf32> to vector<2x8x8xf32>
    %33 = arith.subf %29, %32 : vector<2x8x8xf32>
    %34 = math.exp %33 : vector<2x8x8xf32>
    %cst_17 = arith.constant dense<0.000000e+00> : vector<2x8xf32>
    %35 = vector.multi_reduction <add>, %34, %cst_17 [2] : vector<2x8x8xf32> to vector<2x8xf32>
    %36 = vector.shape_cast %35 : vector<2x8xf32> to vector<2x8x1xf32>
    %37 = tpu.reciprocal %36 {approx = true} : vector<2x8x1xf32> -> vector<2x8x1xf32>
    %38 = vector.broadcast %37 : vector<2x8x1xf32> to vector<2x8x8xf32>
    %39 = arith.mulf %34, %38 : vector<2x8x8xf32>
    %40 = arith.truncf %39 : vector<2x8x8xf32> to vector<2x8x8xbf16>
    "tpu.trace_start"() <{level = 10 : i32, message = "bqk,bkd->bqd"}> : () -> ()
    %cst_18 = arith.constant dense<0.000000e+00> : vector<2x8x8xf32>
    %41 = tpu.matmul %40, %26, %cst_18 {dimension_numbers = #tpu.dot_dimension_numbers<[2], [1], [1], [2], [0, 0, 0, 1, 1, 2], [0], [0]>} : vector<2x8x8xbf16>, vector<2x8x8xbf16>, vector<2x8x8xf32> -> vector<2x8x8xf32>
    "tpu.trace_stop"() : () -> ()
    %42 = arith.truncf %41 : vector<2x8x8xf32> to vector<2x8x8xbf16>
    %43 = vector.extract_strided_slice %17 {offsets = [0, 0, 8], sizes = [2, 8, 8], strides = [1, 1, 1]} : vector<2x8x32xbf16> to vector<2x8x8xbf16>
    %44 = vector.extract_strided_slice %20 {offsets = [0, 0, 8], sizes = [2, 8, 8], strides = [1, 1, 1]} : vector<2x8x32xbf16> to vector<2x8x8xbf16>
    %45 = vector.extract_strided_slice %23 {offsets = [0, 0, 8], sizes = [2, 8, 8], strides = [1, 1, 1]} : vector<2x8x32xbf16> to vector<2x8x8xbf16>
    "tpu.trace_start"() <{level = 10 : i32, message = "bqd,bkd->bqk"}> : () -> ()
    %cst_19 = arith.constant dense<0.000000e+00> : vector<2x8x8xf32>
    %46 = tpu.matmul %43, %44, %cst_19 {dimension_numbers = #tpu.dot_dimension_numbers<[2], [2], [1], [1], [0, 0, 0, 1, 1, 1], [0], [0]>} : vector<2x8x8xbf16>, vector<2x8x8xbf16>, vector<2x8x8xf32> -> vector<2x8x8xf32>
    "tpu.trace_stop"() : () -> ()
    %cst_20 = arith.constant 0.353553385 : f32
    %47 = vector.broadcast %cst_20 : f32 to vector<2x8x8xf32>
    %48 = arith.mulf %46, %47 : vector<2x8x8xf32>
    %cst_21 = arith.constant dense<0xFF800000> : vector<2x8xf32>
    %49 = vector.multi_reduction <maximumf>, %48, %cst_21 [2] : vector<2x8x8xf32> to vector<2x8xf32>
    %50 = vector.shape_cast %49 : vector<2x8xf32> to vector<2x8x1xf32>
    %51 = vector.broadcast %50 : vector<2x8x1xf32> to vector<2x8x8xf32>
    %52 = arith.subf %48, %51 : vector<2x8x8xf32>
    %53 = math.exp %52 : vector<2x8x8xf32>
    %cst_22 = arith.constant dense<0.000000e+00> : vector<2x8xf32>
    %54 = vector.multi_reduction <add>, %53, %cst_22 [2] : vector<2x8x8xf32> to vector<2x8xf32>
    %55 = vector.shape_cast %54 : vector<2x8xf32> to vector<2x8x1xf32>
    %56 = tpu.reciprocal %55 {approx = true} : vector<2x8x1xf32> -> vector<2x8x1xf32>
    %57 = vector.broadcast %56 : vector<2x8x1xf32> to vector<2x8x8xf32>
    %58 = arith.mulf %53, %57 : vector<2x8x8xf32>
    %59 = arith.truncf %58 : vector<2x8x8xf32> to vector<2x8x8xbf16>
    "tpu.trace_start"() <{level = 10 : i32, message = "bqk,bkd->bqd"}> : () -> ()
    %cst_23 = arith.constant dense<0.000000e+00> : vector<2x8x8xf32>
    %60 = tpu.matmul %59, %45, %cst_23 {dimension_numbers = #tpu.dot_dimension_numbers<[2], [1], [1], [2], [0, 0, 0, 1, 1, 2], [0], [0]>} : vector<2x8x8xbf16>, vector<2x8x8xbf16>, vector<2x8x8xf32> -> vector<2x8x8xf32>
    "tpu.trace_stop"() : () -> ()
    %61 = arith.truncf %60 : vector<2x8x8xf32> to vector<2x8x8xbf16>
    %62 = vector.extract_strided_slice %17 {offsets = [0, 0, 16], sizes = [2, 8, 8], strides = [1, 1, 1]} : vector<2x8x32xbf16> to vector<2x8x8xbf16>
    %63 = vector.extract_strided_slice %20 {offsets = [0, 0, 16], sizes = [2, 8, 8], strides = [1, 1, 1]} : vector<2x8x32xbf16> to vector<2x8x8xbf16>
    %64 = vector.extract_strided_slice %23 {offsets = [0, 0, 16], sizes = [2, 8, 8], strides = [1, 1, 1]} : vector<2x8x32xbf16> to vector<2x8x8xbf16>
    "tpu.trace_start"() <{level = 10 : i32, message = "bqd,bkd->bqk"}> : () -> ()
    %cst_24 = arith.constant dense<0.000000e+00> : vector<2x8x8xf32>
    %65 = tpu.matmul %62, %63, %cst_24 {dimension_numbers = #tpu.dot_dimension_numbers<[2], [2], [1], [1], [0, 0, 0, 1, 1, 1], [0], [0]>} : vector<2x8x8xbf16>, vector<2x8x8xbf16>, vector<2x8x8xf32> -> vector<2x8x8xf32>
    "tpu.trace_stop"() : () -> ()
    %cst_25 = arith.constant 0.353553385 : f32
    %66 = vector.broadcast %cst_25 : f32 to vector<2x8x8xf32>
    %67 = arith.mulf %65, %66 : vector<2x8x8xf32>
    %cst_26 = arith.constant dense<0xFF800000> : vector<2x8xf32>
    %68 = vector.multi_reduction <maximumf>, %67, %cst_26 [2] : vector<2x8x8xf32> to vector<2x8xf32>
    %69 = vector.shape_cast %68 : vector<2x8xf32> to vector<2x8x1xf32>
    %70 = vector.broadcast %69 : vector<2x8x1xf32> to vector<2x8x8xf32>
    %71 = arith.subf %67, %70 : vector<2x8x8xf32>
    %72 = math.exp %71 : vector<2x8x8xf32>
    %cst_27 = arith.constant dense<0.000000e+00> : vector<2x8xf32>
    %73 = vector.multi_reduction <add>, %72, %cst_27 [2] : vector<2x8x8xf32> to vector<2x8xf32>
    %74 = vector.shape_cast %73 : vector<2x8xf32> to vector<2x8x1xf32>
    %75 = tpu.reciprocal %74 {approx = true} : vector<2x8x1xf32> -> vector<2x8x1xf32>
    %76 = vector.broadcast %75 : vector<2x8x1xf32> to vector<2x8x8xf32>
    %77 = arith.mulf %72, %76 : vector<2x8x8xf32>
    %78 = arith.truncf %77 : vector<2x8x8xf32> to vector<2x8x8xbf16>
    "tpu.trace_start"() <{level = 10 : i32, message = "bqk,bkd->bqd"}> : () -> ()
    %cst_28 = arith.constant dense<0.000000e+00> : vector<2x8x8xf32>
    %79 = tpu.matmul %78, %64, %cst_28 {dimension_numbers = #tpu.dot_dimension_numbers<[2], [1], [1], [2], [0, 0, 0, 1, 1, 2], [0], [0]>} : vector<2x8x8xbf16>, vector<2x8x8xbf16>, vector<2x8x8xf32> -> vector<2x8x8xf32>
    "tpu.trace_stop"() : () -> ()
    %80 = arith.truncf %79 : vector<2x8x8xf32> to vector<2x8x8xbf16>
    %81 = vector.extract_strided_slice %17 {offsets = [0, 0, 24], sizes = [2, 8, 8], strides = [1, 1, 1]} : vector<2x8x32xbf16> to vector<2x8x8xbf16>
    %82 = vector.extract_strided_slice %20 {offsets = [0, 0, 24], sizes = [2, 8, 8], strides = [1, 1, 1]} : vector<2x8x32xbf16> to vector<2x8x8xbf16>
    %83 = vector.extract_strided_slice %23 {offsets = [0, 0, 24], sizes = [2, 8, 8], strides = [1, 1, 1]} : vector<2x8x32xbf16> to vector<2x8x8xbf16>
    "tpu.trace_start"() <{level = 10 : i32, message = "bqd,bkd->bqk"}> : () -> ()
    %cst_29 = arith.constant dense<0.000000e+00> : vector<2x8x8xf32>
    %84 = tpu.matmul %81, %82, %cst_29 {dimension_numbers = #tpu.dot_dimension_numbers<[2], [2], [1], [1], [0, 0, 0, 1, 1, 1], [0], [0]>} : vector<2x8x8xbf16>, vector<2x8x8xbf16>, vector<2x8x8xf32> -> vector<2x8x8xf32>
    "tpu.trace_stop"() : () -> ()
    %cst_30 = arith.constant 0.353553385 : f32
    %85 = vector.broadcast %cst_30 : f32 to vector<2x8x8xf32>
    %86 = arith.mulf %84, %85 : vector<2x8x8xf32>
    %cst_31 = arith.constant dense<0xFF800000> : vector<2x8xf32>
    %87 = vector.multi_reduction <maximumf>, %86, %cst_31 [2] : vector<2x8x8xf32> to vector<2x8xf32>
    %88 = vector.shape_cast %87 : vector<2x8xf32> to vector<2x8x1xf32>
    %89 = vector.broadcast %88 : vector<2x8x1xf32> to vector<2x8x8xf32>
    %90 = arith.subf %86, %89 : vector<2x8x8xf32>
    %91 = math.exp %90 : vector<2x8x8xf32>
    %cst_32 = arith.constant dense<0.000000e+00> : vector<2x8xf32>
    %92 = vector.multi_reduction <add>, %91, %cst_32 [2] : vector<2x8x8xf32> to vector<2x8xf32>
    %93 = vector.shape_cast %92 : vector<2x8xf32> to vector<2x8x1xf32>
    %94 = tpu.reciprocal %93 {approx = true} : vector<2x8x1xf32> -> vector<2x8x1xf32>
    %95 = vector.broadcast %94 : vector<2x8x1xf32> to vector<2x8x8xf32>
    %96 = arith.mulf %91, %95 : vector<2x8x8xf32>
    %97 = arith.truncf %96 : vector<2x8x8xf32> to vector<2x8x8xbf16>
    "tpu.trace_start"() <{level = 10 : i32, message = "bqk,bkd->bqd"}> : () -> ()
    %cst_33 = arith.constant dense<0.000000e+00> : vector<2x8x8xf32>
    %98 = tpu.matmul %97, %83, %cst_33 {dimension_numbers = #tpu.dot_dimension_numbers<[2], [1], [1], [2], [0, 0, 0, 1, 1, 2], [0], [0]>} : vector<2x8x8xbf16>, vector<2x8x8xbf16>, vector<2x8x8xf32> -> vector<2x8x8xf32>
    "tpu.trace_stop"() : () -> ()
    %99 = arith.truncf %98 : vector<2x8x8xf32> to vector<2x8x8xbf16>
    %100 = tpu.concatenate %42, %61, %80, %99 in 2 : vector<2x8x8xbf16>, vector<2x8x8xbf16>, vector<2x8x8xbf16>, vector<2x8x8xbf16> -> vector<2x8x32xbf16>
    %101 = vector.shape_cast %100 : vector<2x8x32xbf16> to vector<16x32xbf16>
    %c0_34 = arith.constant 0 : index
    %c0_35 = arith.constant 0 : index
    %102 = vector.load %arg7[%c0_34, %c0_35] : memref<32x32xbf16, #tpu.memory_space<vmem>>, vector<32x32xbf16>
    %cst_36 = arith.constant dense<0.000000e+00> : vector<16x32xf32>
    %103 = tpu.matmul %101, %102, %cst_36 {dimension_numbers = #tpu.dot_dimension_numbers<[1], [0], [0], [1], [0, 0, 1, 1], [], []>} : vector<16x32xbf16>, vector<32x32xbf16>, vector<16x32xf32> -> vector<16x32xf32>
    %c0_37 = arith.constant 0 : index
    %c0_38 = arith.constant 0 : index
    %104 = vector.load %arg8[%c0_37, %c0_38] : memref<1x32xf32, #tpu.memory_space<vmem>>, vector<1x32xf32>
    %105 = vector.broadcast %104 : vector<1x32xf32> to vector<16x32xf32>
    %106 = arith.addf %103, %105 : vector<16x32xf32>
    %107 = vector.shape_cast %106 : vector<16x32xf32> to vector<2x8x32xf32>
    %c0_39 = arith.constant 0 : index
    %c0_40 = arith.constant 0 : index
    %c0_41 = arith.constant 0 : index
    %108 = vector.load %arg9[%c0_39, %c0_40, %c0_41] : memref<2x8x32xf32, #tpu.memory_space<vmem>>, vector<2x8x32xf32>
    tpu.vector_store %arg9[%c0_39, %c0_40, %c0_41], %107 {strides = array<i32>} : memref<2x8x32xf32, #tpu.memory_space<vmem>>, vector<2x8x32xf32>,
    return
  }
  func.func @transform_0(%arg0: i32) -> (i32, i32, i32) {
    %c0_i32 = arith.constant 0 : i32
    %c0_i32_0 = arith.constant 0 : i32
    %c0_i32_1 = arith.constant 0 : i32
    return %arg0, %c0_i32, %c0_i32_0 : i32, i32, i32
  }
  func.func @transform_1(%arg0: i32) -> (i32, i32, i32) {
    %c0_i32 = arith.constant 0 : i32
    %c0_i32_0 = arith.constant 0 : i32
    %c0_i32_1 = arith.constant 0 : i32
    return %arg0, %c0_i32, %c0_i32_0 : i32, i32, i32
  }
  func.func @transform_2(%arg0: i32) -> (i32, i32) {
    %c0_i32 = arith.constant 0 : i32
    %c0_i32_0 = arith.constant 0 : i32
    %c0_i32_1 = arith.constant 0 : i32
    return %c0_i32, %c0_i32_0 : i32, i32
  }
  func.func @transform_3(%arg0: i32) -> (i32, i32) {
    %c0_i32 = arith.constant 0 : i32
    %c0_i32_0 = arith.constant 0 : i32
    %c0_i32_1 = arith.constant 0 : i32
    return %c0_i32, %c0_i32_0 : i32, i32
  }
  func.func @transform_4(%arg0: i32) -> (i32, i32) {
    %c0_i32 = arith.constant 0 : i32
    %c0_i32_0 = arith.constant 0 : i32
    %c0_i32_1 = arith.constant 0 : i32
    return %c0_i32, %c0_i32_0 : i32, i32
  }
  func.func @transform_5(%arg0: i32) -> (i32, i32) {
    %c0_i32 = arith.constant 0 : i32
    %c0_i32_0 = arith.constant 0 : i32
    %c0_i32_1 = arith.constant 0 : i32
    return %c0_i32, %c0_i32_0 : i32, i32
  }
  func.func @transform_6(%arg0: i32) -> (i32, i32) {
    %c0_i32 = arith.constant 0 : i32
    %c0_i32_0 = arith.constant 0 : i32
    %c0_i32_1 = arith.constant 0 : i32
    return %c0_i32, %c0_i32_0 : i32, i32
  }
  func.func @transform_7(%arg0: i32) -> (i32, i32) {
    %c0_i32 = arith.constant 0 : i32
    %c0_i32_0 = arith.constant 0 : i32
    %c0_i32_1 = arith.constant 0 : i32
    return %c0_i32, %c0_i32_0 : i32, i32
  }
  func.func @transform_8(%arg0: i32) -> (i32, i32, i32) {
    %c0_i32 = arith.constant 0 : i32
    %c0_i32_0 = arith.constant 0 : i32
    %c0_i32_1 = arith.constant 0 : i32
    return %arg0, %c0_i32, %c0_i32_0 : i32, i32, i32
  }
}

</mosaic_0001>

<llo_original>
// kernel: tpu_custom_call.1
$region0: #{tpu_custom_call.1}
  #allocation0 [shape = 'u32[]', space=smem, size = 0x4, offset = 0x4, fixed_abs, tag = 'smem constant byte address 0x4 - core index']
  #allocation1 [shape = 'u32[72,128]{1,0:T(1,128)}', space=vmem, size = 0x9000, scoped, tag = 'internal scratch']
  %s0 = inlined_call_operand.hbm [shape: f32[2,8,32], index: 0, kind: input, shape index: {}]
  %s1 = inlined_call_operand.hbm [shape: f32[2,8,32], index: 1, kind: input, shape index: {}]
  %s2 = inlined_call_operand.hbm [shape: bf16[32,32], index: 2, kind: input, shape index: {}]
  %s3 = inlined_call_operand.vmem [shape: f32[1,32], index: 3, kind: input, shape index: {}]
  %s4 = inlined_call_operand.hbm [shape: bf16[32,64], index: 4, kind: input, shape index: {}]
  %s5 = inlined_call_operand.vmem [shape: f32[1,64], index: 5, kind: input, shape index: {}]
  %s6 = inlined_call_operand.hbm [shape: bf16[32,32], index: 6, kind: input, shape index: {}]
  %s7 = inlined_call_operand.vmem [shape: f32[1,32], index: 7, kind: input, shape index: {}]
  %s8 = inlined_call_operand.hbm [shape: f32[2,8,32], index: 8, kind: output, shape index: {}]
  %s9 = sld [smem:[#allocation0]]
  $region62: #{tpu_custom_call.1} parent=0
    _
  %s11 = ssub.s32 1, %s9
  %s12 = scalar_select 0, %s11, %s9
  $region1: #{tpu_custom_call.1} parent=0
    #allocation2 [shape = 'u8[8192]{0}', space=vmem, size = 0x2000, scoped, tag = 'input window, operand 0, single buffered']
    #allocation3 [shape = 's32[1]{0}', space=sflag, size = 0x4, scoped, tag = 'scoped memory for tpu_custom_call.1']
    #allocation4 [shape = 's32[1]{0}', space=sflag, size = 0x4, scoped, tag = 'scoped memory for tpu_custom_call.1']
    #allocation5 [shape = 'u8[8192]{0}', space=vmem, size = 0x2000, scoped, tag = 'input window, operand 1, single buffered']
    #allocation6 [shape = 's32[1]{0}', space=sflag, size = 0x4, scoped, tag = 'scoped memory for tpu_custom_call.1']
    #allocation7 [shape = 'u8[8192]{0}', space=vmem, size = 0x2000, scoped, tag = 'input window, operand 2, single buffered']
    #allocation8 [shape = 'u8[8192]{0}', space=vmem, size = 0x2000, scoped, tag = 'input window, operand 4, single buffered']
    #allocation9 [shape = 's32[1]{0}', space=sflag, size = 0x4, scoped, tag = 'scoped memory for tpu_custom_call.1']
    #allocation10 [shape = 'u8[8192]{0}', space=vmem, size = 0x2000, scoped, tag = 'input window, operand 6, single buffered']
    #allocation11 [shape = 'u8[8192]{0}', space=vmem, size = 0x2000, scoped, tag = 'output window, operand 0, single buffered']
    %13 = vsyncpa [#allocation3], 0
    %14 = vsyncpa [#allocation6], 0
    %15 = vsyncpa [#allocation9], 0
    %16 = vsyncpa [#allocation4], 0
    // Predicated region
    $region2: #{tpu_custom_call.1} parent=1 // pred_check
      _
    $region3: #{tpu_custom_call.1} parent=1 // pred_check_branch
      %18 = sbr.rel (0) target = $region5
    $region4: #{tpu_custom_call.1} parent=1 // pred_region
      %20 = vsyncadd [#allocation3], 0
      %s21 = sshll.u32 %s0, 4
      %s22 = int_to_ptr.hbm [resolvable:$true] %s21
      %s23 = sshll.u32 [#allocation2], 4
      %s24 = int_to_ptr.vmem [resolvable:$true] %s23
      %29 = dma.hbm_to_vmem [thread:$0]  %s22, 256, %s24, [#allocation3], 128, 128, 8
    $region5: #{tpu_custom_call.1} parent=1 // pred_fallthru
      _
    // Predicated region
    $region6: #{tpu_custom_call.1} parent=1 // pred_check
      _
    $region7: #{tpu_custom_call.1} parent=1 // pred_check_branch
      %31 = sbr.rel (0) target = $region9
    $region8: #{tpu_custom_call.1} parent=1 // pred_region
      %33 = vsyncadd [#allocation6], 0
      %s34 = sshll.u32 %s1, 4
      %s35 = int_to_ptr.hbm [resolvable:$true] %s34
      %s36 = sshll.u32 [#allocation5], 4
      %s37 = int_to_ptr.vmem [resolvable:$true] %s36
      %42 = dma.hbm_to_vmem [thread:$0]  %s35, 256, %s37, [#allocation6], 128, 128, 8
    $region9: #{tpu_custom_call.1} parent=1 // pred_fallthru
      _
    // Predicated region
    $region10: #{tpu_custom_call.1} parent=1 // pred_check
      _
    $region11: #{tpu_custom_call.1} parent=1 // pred_check_branch
      %44 = sbr.rel (0) target = $region13
    $region12: #{tpu_custom_call.1} parent=1 // pred_region
      %46 = vsyncadd [#allocation6], 0
      %s47 = sshll.u32 %s2, 4
      %s48 = int_to_ptr.hbm [resolvable:$true] %s47
      %s49 = sshll.u32 [#allocation7], 4
      %s50 = int_to_ptr.vmem [resolvable:$true] %s49
      %55 = dma.hbm_to_vmem [thread:$0]  %s48, 256, %s50, [#allocation6], 64, 64, 4
    $region13: #{tpu_custom_call.1} parent=1 // pred_fallthru
      _
    // Predicated region
    $region14: #{tpu_custom_call.1} parent=1 // pred_check
      _
    $region15: #{tpu_custom_call.1} parent=1 // pred_check_branch
      %57 = sbr.rel (0) target = $region17
    $region16: #{tpu_custom_call.1} parent=1 // pred_region
      _
    $region17: #{tpu_custom_call.1} parent=1 // pred_fallthru
      _
    // Predicated region
    $region18: #{tpu_custom_call.1} parent=1 // pred_check
      _
    $region19: #{tpu_custom_call.1} parent=1 // pred_check_branch
      %59 = sbr.rel (0) target = $region21
    $region20: #{tpu_custom_call.1} parent=1 // pred_region
      %61 = vsyncadd [#allocation9], 0
      %s62 = sshll.u32 %s4, 4
      %s63 = int_to_ptr.hbm [resolvable:$true] %s62
      %s64 = sshll.u32 [#allocation8], 4
      %s65 = int_to_ptr.vmem [resolvable:$true] %s64
      %70 = dma.hbm_to_vmem [thread:$0]  %s63, 256, %s65, [#allocation9], 64, 64, 4
    $region21: #{tpu_custom_call.1} parent=1 // pred_fallthru
      _
    // Predicated region
    $region22: #{tpu_custom_call.1} parent=1 // pred_check
      _
    $region23: #{tpu_custom_call.1} parent=1 // pred_check_branch
      %72 = sbr.rel (0) target = $region25
    $region24: #{tpu_custom_call.1} parent=1 // pred_region
      _
    $region25: #{tpu_custom_call.1} parent=1 // pred_fallthru
      _
    // Predicated region
    $region26: #{tpu_custom_call.1} parent=1 // pred_check
      _
    $region27: #{tpu_custom_call.1} parent=1 // pred_check_branch
      %74 = sbr.rel (0) target = $region29
    $region28: #{tpu_custom_call.1} parent=1 // pred_region
      %76 = vsyncadd [#allocation9], 0
      %s77 = sshll.u32 %s6, 4
      %s78 = int_to_ptr.hbm [resolvable:$true] %s77
      %s79 = sshll.u32 [#allocation10], 4
      %s80 = int_to_ptr.vmem [resolvable:$true] %s79
      %85 = dma.hbm_to_vmem [thread:$0]  %s78, 256, %s80, [#allocation9], 64, 64, 4
    $region29: #{tpu_custom_call.1} parent=1 // pred_fallthru
      _
    // Predicated region
    $region30: #{tpu_custom_call.1} parent=1 // pred_check
      _
    $region31: #{tpu_custom_call.1} parent=1 // pred_check_branch
      %87 = sbr.rel (0) target = $region33
    $region32: #{tpu_custom_call.1} parent=1 // pred_region
      _
    $region33: #{tpu_custom_call.1} parent=1 // pred_fallthru
      _
    // Predicated region
    $region34: #{tpu_custom_call.1} parent=1 // pred_check
      _
    $region35: #{tpu_custom_call.1} parent=1 // pred_check_branch
      %89 = sbr.rel (0) target = $region37
    $region36: #{tpu_custom_call.1} parent=1 // pred_region
      %91 = dma.done [#allocation3], 256
    $region37: #{tpu_custom_call.1} parent=1 // pred_fallthru
      _
    // Predicated region
    $region38: #{tpu_custom_call.1} parent=1 // pred_check
      _
    $region39: #{tpu_custom_call.1} parent=1 // pred_check_branch
      %93 = sbr.rel (0) target = $region41
    $region40: #{tpu_custom_call.1} parent=1 // pred_region
      %95 = dma.done [#allocation6], 256
    $region41: #{tpu_custom_call.1} parent=1 // pred_fallthru
      _
    // Predicated region
    $region42: #{tpu_custom_call.1} parent=1 // pred_check
      _
    $region43: #{tpu_custom_call.1} parent=1 // pred_check_branch
      %97 = sbr.rel (0) target = $region45
    $region44: #{tpu_custom_call.1} parent=1 // pred_region
      %99 = dma.done [#allocation6], 256
    $region45: #{tpu_custom_call.1} parent=1 // pred_fallthru
      _
    // Predicated region
    $region46: #{tpu_custom_call.1} parent=1 // pred_check
      _
    $region47: #{tpu_custom_call.1} parent=1 // pred_check_branch
      %101 = sbr.rel (0) target = $region49
    $region48: #{tpu_custom_call.1} parent=1 // pred_region
      %103 = dma.done [#allocation9], 256
    $region49: #{tpu_custom_call.1} parent=1 // pred_fallthru
      _
    // Predicated region
    $region50: #{tpu_custom_call.1} parent=1 // pred_check
      _
    $region51: #{tpu_custom_call.1} parent=1 // pred_check_branch
      %105 = sbr.rel (0) target = $region53
    $region52: #{tpu_custom_call.1} parent=1 // pred_region
      %107 = dma.done [#allocation9], 256
    $region53: #{tpu_custom_call.1} parent=1 // pred_fallthru
      _
    %v109 = vld [vmem:[#allocation2] sm:$0xff]
    %v110 = vld [vmem:[#allocation2 + $0x8] sm:$0xff]
    %v111 = vpack.c.bf16 %v110, %v109
    %v112 = vld [vmem:[#allocation5] sm:$0xff]
    %v113 = vld [vmem:[#allocation5 + $0x8] sm:$0xff]
    %v114 = vpack.c.bf16 %v113, %v112
    %v115 = vld [vmem:[#allocation7] sm:$0xf]
    %v116 = vld [vmem:[#allocation7 + $0x4] sm:$0xf]
    %v117 = vld [vmem:[#allocation7 + $0x8] sm:$0xf]
    %v118 = vld [vmem:[#allocation7 + $0xc] sm:$0xf]
    %v119 = vld [vmem:[%s3] sm:$0x1]
    %v121 = vperm.slane %v119, 0
    %v127 = vunpack.c.l.b16 %v115
    %v128 = vunpack.c.l.b16 %v116
    %v129 = vunpack.c.l.b16 %v117
    %v130 = vunpack.c.l.b16 %v118
    %v131 = vpack.c.b16 %v128, %v127
    %v132 = vpack.c.b16 %v130, %v129
    %vm135 = vcmask 261120
    %v137 = vsel %vm135, %v111, 0
    %139 = vmatpush.bf16.msra.mxu0 0
    %140 = vmatpush.bf16.msra.mxu0 0
    %141 = vmatpush.bf16.msra.mxu0 0
    %142 = vmatpush.bf16.msra.mxu0 0
    %143 = vmatpush.bf16.msra.mxu0 0
    %144 = vmatpush.bf16.msra.mxu0 0
    %145 = vmatpush.bf16.msra.mxu0 %v132
    %146 = vmatpush.bf16.msra.mxu0 %v131
    %147 = vmatmul.bf16.gmra.mxu0 %v137
    %v148 = vpop.f32.mrf.mxu0
    %v149 = vadd.f32 %v121, %v148
    %v150 = vpop.f32.mrf.mxu0
    %v151 = vadd.f32 %v121, %v150
    %152 = vdwg.mxu0
    %v153 = vld [vmem:[#allocation8] sm:$0xf]
    %v154 = vld [vmem:[#allocation8 + $0x4] sm:$0xf]
    %v155 = vld [vmem:[#allocation8 + $0x8] sm:$0xf]
    %v156 = vld [vmem:[#allocation8 + $0xc] sm:$0xf]
    %v157 = vld [vmem:[%s5] sm:$0x1]
    %v159 = vperm.slane %v157, 0
    %v165 = vunpack.c.l.b16 %v153
    %v166 = vunpack.c.l.b16 %v154
    %v167 = vunpack.c.l.b16 %v155
    %v168 = vunpack.c.l.b16 %v156
    %v169 = vpack.c.b16 %v166, %v165
    %v170 = vpack.c.b16 %v168, %v167
    %v174 = vsel %vm135, %v114, 0
    %176 = vmatpush.bf16.msra.mxu0 0
    %177 = vmatpush.bf16.msra.mxu0 0
    %178 = vmatpush.bf16.msra.mxu0 0
    %179 = vmatpush.bf16.msra.mxu0 0
    %180 = vmatpush.bf16.msra.mxu0 0
    %181 = vmatpush.bf16.msra.mxu0 0
    %182 = vmatpush.bf16.msra.mxu0 %v170
    %183 = vmatpush.bf16.msra.mxu0 %v169
    %184 = vmatmul.bf16.gmra.mxu0 %v174
    %v185 = vpop.f32.mrf.mxu0
    %v186 = vadd.f32 %v159, %v185
    %v187 = vpop.f32.mrf.mxu0
    %v188 = vadd.f32 %v159, %v187
    %189 = vdwg.mxu0
    %v190 = vpack.c.bf16 %v149, %v149
    %v191 = vpack.c.bf16 %v151, %v151
    %v192 = vpack.c.bf16 %v186, %v186
    %v193 = vpack.c.bf16 %v188, %v188
    %vm194 = vcmask 64512
    %v196 = vsel %vm194, %v190, 0
    %v199 = vsel %vm194, %v192, 0
    %201 = vmatpush.bf16.xpose.msra.mxu0 0
    %202 = vmatpush.bf16.xpose.msra.mxu0 0
    %203 = vmatpush.bf16.xpose.msra.mxu0 0
    %204 = vmatpush.bf16.xpose.msra.mxu0 0
    %205 = vmatpush.bf16.xpose.msra.mxu0 0
    %206 = vmatpush.bf16.xpose.msra.mxu0 0
    %207 = vmatpush.bf16.xpose.msra.mxu0 0
    %208 = vmatpush.bf16.xpose.msra.mxu0 %v199
    %209 = vmatmul.bf16.gmra.mxu0 %v196
    %v210 = vpop.f32.mrf.mxu0
    %v211 = vadd.f32 0.0, %v210
    %v212 = vpop.f32.mrf.mxu0
    %213 = vdwg.mxu0
    %v215 = vsel %vm194, %v191, 0
    %v218 = vsel %vm194, %v193, 0
    %220 = vmatpush.bf16.xpose.msra.mxu0 0
    %221 = vmatpush.bf16.xpose.msra.mxu0 0
    %222 = vmatpush.bf16.xpose.msra.mxu0 0
    %223 = vmatpush.bf16.xpose.msra.mxu0 0
    %224 = vmatpush.bf16.xpose.msra.mxu0 0
    %225 = vmatpush.bf16.xpose.msra.mxu0 0
    %226 = vmatpush.bf16.xpose.msra.mxu0 0
    %227 = vmatpush.bf16.xpose.msra.mxu0 %v218
    %228 = vmatmul.bf16.gmra.mxu0 %v215
    %v229 = vpop.f32.mrf.mxu0
    %v230 = vadd.f32 0.0, %v229
    %v231 = vpop.f32.mrf.mxu0
    %232 = vdwg.mxu0
    %v233 = vmul.f32 %v211, 0.35355338
    %v234 = vmul.f32 %v230, 0.35355338
    %v235 = vsel %vm194, %v233, -inf
    %236 = vmax.xlane.f32.xlu0 %v235
    %v237 = vpop.xlane.xlu0 %236
    %v238 = vsel %vm194, %v234, -inf
    %239 = vmax.xlane.f32.xlu0 %v238
    %v240 = vpop.xlane.xlu0 %239
    %v241 = vsub.f32 %v233, %v237
    %v242 = vsub.f32 %v234, %v240
    %v243 = vmul.f32 %v241, 1.442695
    %v244 = vpow.pop %v243
    %v245 = vmul.f32 %v242, 1.442695
    %v246 = vpow.pop %v245
    %v247 = vsel %vm194, %v244, 0.0
    %248 = vadd.xlane.f32.xlu0 %v247
    %v249 = vpop.xlane.xlu0 %248
    %v250 = vsel %vm194, %v246, 0.0
    %251 = vadd.xlane.f32.xlu0 %v250
    %v252 = vpop.xlane.xlu0 %251
    %v253 = vrcp.pop %v249
    %v254 = vrcp.pop %v252
    %v255 = vmul.f32 %v244, %v253
    %v256 = vmul.f32 %v246, %v254
    %v257 = vpack.c.bf16 %v255, %v255
    %v258 = vpack.c.bf16 %v256, %v256
    %v260 = vunpack.c.l.b16 %v192
    %v261 = vpack.c.b16 %v260, %v260
    %262 = vrot.lane.b32.xlu0 %v261, 96
    %v263 = vpop.permute.xlu0 %262
    %v265 = vsel %vm194, %v257, 0
    %vm267 = vcmask 1043456
    %v269 = vsel %vm267, %v263, 0
    %271 = vmatpush.bf16.msra.mxu0 0
    %272 = vmatpush.bf16.msra.mxu0 0
    %273 = vmatpush.bf16.msra.mxu0 0
    %274 = vmatpush.bf16.msra.mxu0 0
    %275 = vmatpush.bf16.msra.mxu0 0
    %276 = vmatpush.bf16.msra.mxu0 0
    %277 = vmatpush.bf16.msra.mxu0 0
    %278 = vmatpush.bf16.msra.mxu0 %v269
    %279 = vmatmul.bf16.gmra.mxu0 %v265
    %v280 = vpop.f32.mrf.mxu0
    %v281 = vadd.f32 0.0, %v280
    %v282 = vpop.f32.mrf.mxu0
    %283 = vdwg.mxu0
    %v285 = vunpack.c.l.b16 %v193
    %v286 = vpack.c.b16 %v285, %v285
    %287 = vrot.lane.b32.xlu0 %v286, 96
    %v288 = vpop.permute.xlu0 %287
    %v290 = vsel %vm194, %v258, 0
    %v293 = vsel %vm267, %v288, 0
    %295 = vmatpush.bf16.msra.mxu0 0
    %296 = vmatpush.bf16.msra.mxu0 0
    %297 = vmatpush.bf16.msra.mxu0 0
    %298 = vmatpush.bf16.msra.mxu0 0
    %299 = vmatpush.bf16.msra.mxu0 0
    %300 = vmatpush.bf16.msra.mxu0 0
    %301 = vmatpush.bf16.msra.mxu0 0
    %302 = vmatpush.bf16.msra.mxu0 %v293
    %303 = vmatmul.bf16.gmra.mxu0 %v290
    %v304 = vpop.f32.mrf.mxu0
    %v305 = vadd.f32 0.0, %v304
    %v306 = vpop.f32.mrf.mxu0
    %307 = vdwg.mxu0
    %v308 = vpack.c.bf16 %v281, %v281
    %v309 = vpack.c.bf16 %v305, %v305
    %v311 = vunpack.c.l.b16 %v190
    %v312 = vpack.c.b16 %v311, %v311
    %313 = vrot.lane.b32.xlu0 %v312, 120
    %v314 = vpop.permute.xlu0 %313
    %315 = vrot.lane.b32.xlu0 %v261, 120
    %v316 = vpop.permute.xlu0 %315
    %v318 = vsel %vm194, %v314, 0
    %v321 = vsel %vm194, %v316, 0
    %323 = vmatpush.bf16.xpose.msra.mxu0 0
    %324 = vmatpush.bf16.xpose.msra.mxu0 0
    %325 = vmatpush.bf16.xpose.msra.mxu0 0
    %326 = vmatpush.bf16.xpose.msra.mxu0 0
    %327 = vmatpush.bf16.xpose.msra.mxu0 0
    %328 = vmatpush.bf16.xpose.msra.mxu0 0
    %329 = vmatpush.bf16.xpose.msra.mxu0 0
    %330 = vmatpush.bf16.xpose.msra.mxu0 %v321
    %331 = vmatmul.bf16.gmra.mxu0 %v318
    %v332 = vpop.f32.mrf.mxu0
    %v333 = vadd.f32 0.0, %v332
    %v334 = vpop.f32.mrf.mxu0
    %335 = vdwg.mxu0
    %v337 = vunpack.c.l.b16 %v191
    %v338 = vpack.c.b16 %v337, %v337
    %339 = vrot.lane.b32.xlu0 %v338, 120
    %v340 = vpop.permute.xlu0 %339
    %341 = vrot.lane.b32.xlu0 %v286, 120
    %v342 = vpop.permute.xlu0 %341
    %v344 = vsel %vm194, %v340, 0
    %v347 = vsel %vm194, %v342, 0
    %349 = vmatpush.bf16.xpose.msra.mxu0 0
    %350 = vmatpush.bf16.xpose.msra.mxu0 0
    %351 = vmatpush.bf16.xpose.msra.mxu0 0
    %352 = vmatpush.bf16.xpose.msra.mxu0 0
    %353 = vmatpush.bf16.xpose.msra.mxu0 0
    %354 = vmatpush.bf16.xpose.msra.mxu0 0
    %355 = vmatpush.bf16.xpose.msra.mxu0 0
    %356 = vmatpush.bf16.xpose.msra.mxu0 %v347
    %357 = vmatmul.bf16.gmra.mxu0 %v344
    %v358 = vpop.f32.mrf.mxu0
    %v359 = vadd.f32 0.0, %v358
    %v360 = vpop.f32.mrf.mxu0
    %361 = vdwg.mxu0
    %v362 = vmul.f32 %v333, 0.35355338
    %v363 = vmul.f32 %v359, 0.35355338
    %v364 = vsel %vm194, %v362, -inf
    %365 = vmax.xlane.f32.xlu0 %v364
    %v366 = vpop.xlane.xlu0 %365
    %v367 = vsel %vm194, %v363, -inf
    %368 = vmax.xlane.f32.xlu0 %v367
    %v369 = vpop.xlane.xlu0 %368
    %v370 = vsub.f32 %v362, %v366
    %v371 = vsub.f32 %v363, %v369
    %v372 = vmul.f32 %v370, 1.442695
    %v373 = vpow.pop %v372
    %v374 = vmul.f32 %v371, 1.442695
    %v375 = vpow.pop %v374
    %v376 = vsel %vm194, %v373, 0.0
    %377 = vadd.xlane.f32.xlu0 %v376
    %v378 = vpop.xlane.xlu0 %377
    %v379 = vsel %vm194, %v375, 0.0
    %380 = vadd.xlane.f32.xlu0 %v379
    %v381 = vpop.xlane.xlu0 %380
    %v382 = vrcp.pop %v378
    %v383 = vrcp.pop %v381
    %v384 = vmul.f32 %v373, %v382
    %v385 = vmul.f32 %v375, %v383
    %v386 = vpack.c.bf16 %v384, %v384
    %v387 = vpack.c.bf16 %v385, %v385
    %388 = vrot.lane.b32.xlu0 %v261, 88
    %v389 = vpop.permute.xlu0 %388
    %v391 = vsel %vm194, %v386, 0
    %v394 = vsel %vm267, %v389, 0
    %396 = vmatpush.bf16.msra.mxu0 0
    %397 = vmatpush.bf16.msra.mxu0 0
    %398 = vmatpush.bf16.msra.mxu0 0
    %399 = vmatpush.bf16.msra.mxu0 0
    %400 = vmatpush.bf16.msra.mxu0 0
    %401 = vmatpush.bf16.msra.mxu0 0
    %402 = vmatpush.bf16.msra.mxu0 0
    %403 = vmatpush.bf16.msra.mxu0 %v394
    %404 = vmatmul.bf16.gmra.mxu0 %v391
    %v405 = vpop.f32.mrf.mxu0
    %v406 = vadd.f32 0.0, %v405
    %v407 = vpop.f32.mrf.mxu0
    %408 = vdwg.mxu0
    %409 = vrot.lane.b32.xlu0 %v286, 88
    %v410 = vpop.permute.xlu0 %409
    %v412 = vsel %vm194, %v387, 0
    %v415 = vsel %vm267, %v410, 0
    %417 = vmatpush.bf16.msra.mxu0 0
    %418 = vmatpush.bf16.msra.mxu0 0
    %419 = vmatpush.bf16.msra.mxu0 0
    %420 = vmatpush.bf16.msra.mxu0 0
    %421 = vmatpush.bf16.msra.mxu0 0
    %422 = vmatpush.bf16.msra.mxu0 0
    %423 = vmatpush.bf16.msra.mxu0 0
    %424 = vmatpush.bf16.msra.mxu0 %v415
    %425 = vmatmul.bf16.gmra.mxu0 %v412
    %v426 = vpop.f32.mrf.mxu0
    %v427 = vadd.f32 0.0, %v426
    %v428 = vpop.f32.mrf.mxu0
    %429 = vdwg.mxu0
    %v430 = vpack.c.bf16 %v406, %v406
    %v431 = vpack.c.bf16 %v427, %v427
    %432 = vrot.lane.b32.xlu0 %v312, 112
    %v433 = vpop.permute.xlu0 %432
    %434 = vrot.lane.b32.xlu0 %v261, 112
    %v435 = vpop.permute.xlu0 %434
    %v437 = vsel %vm194, %v433, 0
    %v440 = vsel %vm194, %v435, 0
    %442 = vmatpush.bf16.xpose.msra.mxu0 0
    %443 = vmatpush.bf16.xpose.msra.mxu0 0
    %444 = vmatpush.bf16.xpose.msra.mxu0 0
    %445 = vmatpush.bf16.xpose.msra.mxu0 0
    %446 = vmatpush.bf16.xpose.msra.mxu0 0
    %447 = vmatpush.bf16.xpose.msra.mxu0 0
    %448 = vmatpush.bf16.xpose.msra.mxu0 0
    %449 = vmatpush.bf16.xpose.msra.mxu0 %v440
    %450 = vmatmul.bf16.gmra.mxu0 %v437
    %v451 = vpop.f32.mrf.mxu0
    %v452 = vadd.f32 0.0, %v451
    %v453 = vpop.f32.mrf.mxu0
    %454 = vdwg.mxu0
    %455 = vrot.lane.b32.xlu0 %v338, 112
    %v456 = vpop.permute.xlu0 %455
    %457 = vrot.lane.b32.xlu0 %v286, 112
    %v458 = vpop.permute.xlu0 %457
    %v460 = vsel %vm194, %v456, 0
    %v463 = vsel %vm194, %v458, 0
    %465 = vmatpush.bf16.xpose.msra.mxu0 0
    %466 = vmatpush.bf16.xpose.msra.mxu0 0
    %467 = vmatpush.bf16.xpose.msra.mxu0 0
    %468 = vmatpush.bf16.xpose.msra.mxu0 0
    %469 = vmatpush.bf16.xpose.msra.mxu0 0
    %470 = vmatpush.bf16.xpose.msra.mxu0 0
    %471 = vmatpush.bf16.xpose.msra.mxu0 0
    %472 = vmatpush.bf16.xpose.msra.mxu0 %v463
    %473 = vmatmul.bf16.gmra.mxu0 %v460
    %v474 = vpop.f32.mrf.mxu0
    %v475 = vadd.f32 0.0, %v474
    %v476 = vpop.f32.mrf.mxu0
    %477 = vdwg.mxu0
    %v478 = vmul.f32 %v452, 0.35355338
    %v479 = vmul.f32 %v475, 0.35355338
    %v480 = vsel %vm194, %v478, -inf
    %481 = vmax.xlane.f32.xlu0 %v480
    %v482 = vpop.xlane.xlu0 %481
    %v483 = vsel %vm194, %v479, -inf
    %484 = vmax.xlane.f32.xlu0 %v483
    %v485 = vpop.xlane.xlu0 %484
    %v486 = vsub.f32 %v478, %v482
    %v487 = vsub.f32 %v479, %v485
    %v488 = vmul.f32 %v486, 1.442695
    %v489 = vpow.pop %v488
    %v490 = vmul.f32 %v487, 1.442695
    %v491 = vpow.pop %v490
    %v492 = vsel %vm194, %v489, 0.0
    %493 = vadd.xlane.f32.xlu0 %v492
    %v494 = vpop.xlane.xlu0 %493
    %v495 = vsel %vm194, %v491, 0.0
    %496 = vadd.xlane.f32.xlu0 %v495
    %v497 = vpop.xlane.xlu0 %496
    %v498 = vrcp.pop %v494
    %v499 = vrcp.pop %v497
    %v500 = vmul.f32 %v489, %v498
    %v501 = vmul.f32 %v491, %v499
    %v502 = vpack.c.bf16 %v500, %v500
    %v503 = vpack.c.bf16 %v501, %v501
    %504 = vrot.lane.b32.xlu0 %v261, 80
    %v505 = vpop.permute.xlu0 %504
    %v507 = vsel %vm194, %v502, 0
    %v510 = vsel %vm267, %v505, 0
    %512 = vmatpush.bf16.msra.mxu0 0
    %513 = vmatpush.bf16.msra.mxu0 0
    %514 = vmatpush.bf16.msra.mxu0 0
    %515 = vmatpush.bf16.msra.mxu0 0
    %516 = vmatpush.bf16.msra.mxu0 0
    %517 = vmatpush.bf16.msra.mxu0 0
    %518 = vmatpush.bf16.msra.mxu0 0
    %519 = vmatpush.bf16.msra.mxu0 %v510
    %520 = vmatmul.bf16.gmra.mxu0 %v507
    %v521 = vpop.f32.mrf.mxu0
    %v522 = vadd.f32 0.0, %v521
    %v523 = vpop.f32.mrf.mxu0
    %524 = vdwg.mxu0
    %525 = vrot.lane.b32.xlu0 %v286, 80
    %v526 = vpop.permute.xlu0 %525
    %v528 = vsel %vm194, %v503, 0
    %v531 = vsel %vm267, %v526, 0
    %533 = vmatpush.bf16.msra.mxu0 0
    %534 = vmatpush.bf16.msra.mxu0 0
    %535 = vmatpush.bf16.msra.mxu0 0
    %536 = vmatpush.bf16.msra.mxu0 0
    %537 = vmatpush.bf16.msra.mxu0 0
    %538 = vmatpush.bf16.msra.mxu0 0
    %539 = vmatpush.bf16.msra.mxu0 0
    %540 = vmatpush.bf16.msra.mxu0 %v531
    %541 = vmatmul.bf16.gmra.mxu0 %v528
    %v542 = vpop.f32.mrf.mxu0
    %v543 = vadd.f32 0.0, %v542
    %v544 = vpop.f32.mrf.mxu0
    %545 = vdwg.mxu0
    %v546 = vpack.c.bf16 %v522, %v522
    %v547 = vpack.c.bf16 %v543, %v543
    %548 = vrot.lane.b32.xlu0 %v312, 104
    %v549 = vpop.permute.xlu0 %548
    %550 = vrot.lane.b32.xlu0 %v261, 104
    %v551 = vpop.permute.xlu0 %550
    %v553 = vsel %vm194, %v549, 0
    %v556 = vsel %vm194, %v551, 0
    %558 = vmatpush.bf16.xpose.msra.mxu0 0
    %559 = vmatpush.bf16.xpose.msra.mxu0 0
    %560 = vmatpush.bf16.xpose.msra.mxu0 0
    %561 = vmatpush.bf16.xpose.msra.mxu0 0
    %562 = vmatpush.bf16.xpose.msra.mxu0 0
    %563 = vmatpush.bf16.xpose.msra.mxu0 0
    %564 = vmatpush.bf16.xpose.msra.mxu0 0
    %565 = vmatpush.bf16.xpose.msra.mxu0 %v556
    %566 = vmatmul.bf16.gmra.mxu0 %v553
    %v567 = vpop.f32.mrf.mxu0
    %v568 = vadd.f32 0.0, %v567
    %v569 = vpop.f32.mrf.mxu0
    %570 = vdwg.mxu0
    %571 = vrot.lane.b32.xlu0 %v338, 104
    %v572 = vpop.permute.xlu0 %571
    %573 = vrot.lane.b32.xlu0 %v286, 104
    %v574 = vpop.permute.xlu0 %573
    %v576 = vsel %vm194, %v572, 0
    %v579 = vsel %vm194, %v574, 0
    %581 = vmatpush.bf16.xpose.msra.mxu0 0
    %582 = vmatpush.bf16.xpose.msra.mxu0 0
    %583 = vmatpush.bf16.xpose.msra.mxu0 0
    %584 = vmatpush.bf16.xpose.msra.mxu0 0
    %585 = vmatpush.bf16.xpose.msra.mxu0 0
    %586 = vmatpush.bf16.xpose.msra.mxu0 0
    %587 = vmatpush.bf16.xpose.msra.mxu0 0
    %588 = vmatpush.bf16.xpose.msra.mxu0 %v579
    %589 = vmatmul.bf16.gmra.mxu0 %v576
    %v590 = vpop.f32.mrf.mxu0
    %v591 = vadd.f32 0.0, %v590
    %v592 = vpop.f32.mrf.mxu0
    %593 = vdwg.mxu0
    %v594 = vmul.f32 %v568, 0.35355338
    %v595 = vmul.f32 %v591, 0.35355338
    %v596 = vsel %vm194, %v594, -inf
    %597 = vmax.xlane.f32.xlu0 %v596
    %v598 = vpop.xlane.xlu0 %597
    %v599 = vsel %vm194, %v595, -inf
    %600 = vmax.xlane.f32.xlu0 %v599
    %v601 = vpop.xlane.xlu0 %600
    %v602 = vsub.f32 %v594, %v598
    %v603 = vsub.f32 %v595, %v601
    %v604 = vmul.f32 %v602, 1.442695
    %v605 = vpow.pop %v604
    %v606 = vmul.f32 %v603, 1.442695
    %v607 = vpow.pop %v606
    %v608 = vsel %vm194, %v605, 0.0
    %609 = vadd.xlane.f32.xlu0 %v608
    %v610 = vpop.xlane.xlu0 %609
    %v611 = vsel %vm194, %v607, 0.0
    %612 = vadd.xlane.f32.xlu0 %v611
    %v613 = vpop.xlane.xlu0 %612
    %v614 = vrcp.pop %v610
    %v615 = vrcp.pop %v613
    %v616 = vmul.f32 %v605, %v614
    %v617 = vmul.f32 %v607, %v615
    %v618 = vpack.c.bf16 %v616, %v616
    %v619 = vpack.c.bf16 %v617, %v617
    %620 = vrot.lane.b32.xlu0 %v261, 72
    %v621 = vpop.permute.xlu0 %620
    %v623 = vsel %vm194, %v618, 0
    %v626 = vsel %vm267, %v621, 0
    %628 = vmatpush.bf16.msra.mxu0 0
    %629 = vmatpush.bf16.msra.mxu0 0
    %630 = vmatpush.bf16.msra.mxu0 0
    %631 = vmatpush.bf16.msra.mxu0 0
    %632 = vmatpush.bf16.msra.mxu0 0
    %633 = vmatpush.bf16.msra.mxu0 0
    %634 = vmatpush.bf16.msra.mxu0 0
    %635 = vmatpush.bf16.msra.mxu0 %v626
    %636 = vmatmul.bf16.gmra.mxu0 %v623
    %v637 = vpop.f32.mrf.mxu0
    %v638 = vadd.f32 0.0, %v637
    %v639 = vpop.f32.mrf.mxu0
    %640 = vdwg.mxu0
    %641 = vrot.lane.b32.xlu0 %v286, 72
    %v642 = vpop.permute.xlu0 %641
    %v644 = vsel %vm194, %v619, 0
    %v647 = vsel %vm267, %v642, 0
    %649 = vmatpush.bf16.msra.mxu0 0
    %650 = vmatpush.bf16.msra.mxu0 0
    %651 = vmatpush.bf16.msra.mxu0 0
    %652 = vmatpush.bf16.msra.mxu0 0
    %653 = vmatpush.bf16.msra.mxu0 0
    %654 = vmatpush.bf16.msra.mxu0 0
    %655 = vmatpush.bf16.msra.mxu0 0
    %656 = vmatpush.bf16.msra.mxu0 %v647
    %657 = vmatmul.bf16.gmra.mxu0 %v644
    %v658 = vpop.f32.mrf.mxu0
    %v659 = vadd.f32 0.0, %v658
    %v660 = vpop.f32.mrf.mxu0
    %661 = vdwg.mxu0
    %v662 = vpack.c.bf16 %v638, %v638
    %v663 = vpack.c.bf16 %v659, %v659
    %v666 = vunpack.c.l.b16 %v430
    %v667 = vunpack.c.l.b16 %v431
    %v668 = vpack.c.b16 %v666, %v666
    %v669 = vpack.c.b16 %v667, %v667
    %670 = vrot.lane.b32.xlu0 %v668, 8
    %v671 = vpop.permute.xlu0 %670
    %672 = vrot.lane.b32.xlu0 %v669, 8
    %v673 = vpop.permute.xlu0 %672
    %v676 = vunpack.c.l.b16 %v546
    %v677 = vunpack.c.l.b16 %v547
    %v678 = vpack.c.b16 %v676, %v676
    %v679 = vpack.c.b16 %v677, %v677
    %680 = vrot.lane.b32.xlu0 %v678, 16
    %v681 = vpop.permute.xlu0 %680
    %682 = vrot.lane.b32.xlu0 %v679, 16
    %v683 = vpop.permute.xlu0 %682
    %v686 = vunpack.c.l.b16 %v662
    %v687 = vunpack.c.l.b16 %v663
    %v688 = vpack.c.b16 %v686, %v686
    %v689 = vpack.c.b16 %v687, %v687
    %690 = vrot.lane.b32.xlu0 %v688, 24
    %v691 = vpop.permute.xlu0 %690
    %692 = vrot.lane.b32.xlu0 %v689, 24
    %v693 = vpop.permute.xlu0 %692
    %v696 = vsel %vm194, %v308, %v671
    %v699 = vsel %vm194, %v309, %v673
    %vm700 = vcmask 130048
    %v702 = vsel %vm700, %v696, %v681
    %v704 = vsel %vm700, %v699, %v683
    %vm705 = vcmask 195584
    %v707 = vsel %vm705, %v702, %v691
    %v709 = vsel %vm705, %v704, %v693
    %v710 = vld [vmem:[#allocation10] sm:$0xf]
    %v711 = vld [vmem:[#allocation10 + $0x4] sm:$0xf]
    %v712 = vld [vmem:[#allocation10 + $0x8] sm:$0xf]
    %v713 = vld [vmem:[#allocation10 + $0xc] sm:$0xf]
    %v714 = vld [vmem:[%s7] sm:$0x1]
    %v716 = vperm.slane %v714, 0
    %v720 = vunpack.c.l.b16 %v707
    %v721 = vunpack.c.l.b16 %v709
    %v722 = vpack.c.b16 %v721, %v720
    %v727 = vunpack.c.l.b16 %v710
    %v728 = vunpack.c.l.b16 %v711
    %v729 = vunpack.c.l.b16 %v712
    %v730 = vunpack.c.l.b16 %v713
    %v731 = vpack.c.b16 %v728, %v727
    %v732 = vpack.c.b16 %v730, %v729
    %v736 = vsel %vm135, %v722, 0
    %738 = vmatpush.bf16.msra.mxu0 0
    %739 = vmatpush.bf16.msra.mxu0 0
    %740 = vmatpush.bf16.msra.mxu0 0
    %741 = vmatpush.bf16.msra.mxu0 0
    %742 = vmatpush.bf16.msra.mxu0 0
    %743 = vmatpush.bf16.msra.mxu0 0
    %744 = vmatpush.bf16.msra.mxu0 %v732
    %745 = vmatpush.bf16.msra.mxu0 %v731
    %746 = vmatmul.bf16.gmra.mxu0 %v736
    %v747 = vpop.f32.mrf.mxu0
    %v748 = vadd.f32 %v716, %v747
    %v749 = vpop.f32.mrf.mxu0
    %v750 = vadd.f32 %v716, %v749
    %751 = vdwg.mxu0
    %752 = vst.msk [vmem:[#allocation11] sm:$0xff] %vm135, %v748
    %753 = vst.msk [vmem:[#allocation11 + $0x8] sm:$0xff] %vm135, %v750
    // Predicated region
    $region54: #{tpu_custom_call.1} parent=1 // pred_check
      _
    $region55: #{tpu_custom_call.1} parent=1 // pred_check_branch
      %755 = sbr.rel (0) target = $region57
    $region56: #{tpu_custom_call.1} parent=1 // pred_region
      %757 = vsyncadd [#allocation4], 0
      %s758 = sshll.u32 [#allocation11], 4
      %s759 = int_to_ptr.vmem [resolvable:$true] %s758
      %s760 = sshll.u32 %s8, 4
      %s761 = int_to_ptr.hbm [resolvable:$true] %s760
      %766 = dma.vmem_to_hbm [thread:$0]  %s759, 256, %s761, [#allocation4], 128, 128, 8
    $region57: #{tpu_custom_call.1} parent=1 // pred_fallthru
      _
    // Predicated region
    $region58: #{tpu_custom_call.1} parent=1 // pred_check
      _
    $region59: #{tpu_custom_call.1} parent=1 // pred_check_branch
      %768 = sbr.rel (0) target = $region61
    $region60: #{tpu_custom_call.1} parent=1 // pred_region
      %770 = dma.done [#allocation4], 256
    $region61: #{tpu_custom_call.1} parent=1 // pred_fallthru
      _
    %771 = vsyncpa [#allocation3], 1
    %772 = vsyncpa [#allocation6], 1
    %773 = vsyncpa [#allocation9], 1
    %774 = vsyncpa [#allocation4], 1

</llo_original>
